<compile_context>
chip_gen: v6e
topology: v6e:2x2x1
jax: 0.10.0
libtpu: 0.0.40
codegen_flags: <defaults>
</compile_context>

<pallas_src>
from math import ceil

import jax
import jax.numpy as jnp
import numpy as np
from jax.experimental import pallas as pl
from jax.experimental.pallas import tpu as pltpu


def _round_up(x, m):
    return (x + m - 1) // m * m


def _row_tile(n):
    """Row tile: multiple of 16 (bf16 sublane packing), capped at 512, and small
    enough that the row grid has >= 2 steps when n allows (v7x has 2 TCs)."""
    half = -(-n // 2)  # ceil(n / 2)
    return max(16, min(512, _round_up(half, 16)))


def _mlp_head(x_ref, w1_ref, b1_ref, w2_ref, b2_ref):
    # TODO(synk): F.dropout treated as identity (inference mode).
    h = jnp.dot(x_ref[...], w1_ref[...], preferred_element_type=jnp.float32)
    h = jnp.maximum(h + b1_ref[...], 0.0)                 # f32 bias + ReLU
    y = jnp.dot(h.astype(jnp.bfloat16), w2_ref[...],
                preferred_element_type=jnp.float32)
    return jnp.maximum(y + b2_ref[...], 0.0)              # reference ReLUs after lin2 too


def _make_kernel(has_unpool, num_classes):
    if has_unpool:
        def kernel(x_ref, w1_ref, b1_ref, w2_ref, b2_ref, s_ref, wc_ref,
                   cls_ref, lat_ref):
            y = _mlp_head(x_ref, w1_ref, b1_ref, w2_ref, b2_ref)
            # Finest unpool level fused per row-tile: softmax(s_fine) @ w_coarse.
            s = s_ref[...]                                 # f32 softmax arithmetic
            s = s - jnp.max(s, axis=1, keepdims=True)
            e = jnp.exp(s)
            # approx reciprocal error (~2^-12) is below the bf16 matmul truncation.
            p = e * pl.reciprocal(jnp.sum(e, axis=1, keepdims=True), approx=True)
            y = y + jnp.dot(p.astype(jnp.bfloat16), wc_ref[...],
                            preferred_element_type=jnp.float32)
            cls_ref[...] = y[:, :num_classes]
            lat_ref[...] = y[:, num_classes:]
    else:
        def kernel(x_ref, w1_ref, b1_ref, w2_ref, b2_ref, cls_ref, lat_ref):
            y = _mlp_head(x_ref, w1_ref, b1_ref, w2_ref, b2_ref)
            cls_ref[...] = y[:, :num_classes]
            lat_ref[...] = y[:, num_classes:]
    return kernel


def mlp_classifier_forward(x, adj, ses, params, num_classes):
    """Mirrors MLPClassifier.forward(x, adj, ses) -> (x[:, :C], x[:, C:])."""
    del adj  # adj is unused by the reference forward pass
    n, num_features = x.shape
    out_dim = params["w2"].shape[1]
    lat_dim = out_dim - num_classes

    # ---- grid-invariant prep (tiny, wrapper-side XLA) ------------------------
    x_bf = x.astype(jnp.bfloat16)                 # MXU uses bf16 anyway; halves x DMA
    w1 = params["w1"].astype(jnp.bfloat16)
    b1 = params["b1"].reshape(1, -1).astype(jnp.float32)
    w2 = params["w2"].astype(jnp.bfloat16)
    b2 = params["b2"].reshape(1, -1).astype(jnp.float32)

    tm = _row_tile(n)
    grid = (pl.cdiv(n, tm),)

    in_specs = [
        pl.BlockSpec((tm, num_features), lambda i: (i, 0)),   # x: row-tiled stream
        pl.BlockSpec(w1.shape, lambda i: (0, 0)),             # weights: VMEM-resident
        pl.BlockSpec(b1.shape, lambda i: (0, 0)),
        pl.BlockSpec(w2.shape, lambda i: (0, 0)),
        pl.BlockSpec(b2.shape, lambda i: (0, 0)),
    ]
    args = [x_bf, w1, b1, w2, b2]

    has_unpool = ses is not None and len(ses) > 0
    if has_unpool:
        # Hoist the coarse unpool chain: it only depends on grid-invariant inputs,
        # so re-running it every grid step was wasted EUP/XLU/MXU work.
        w_coarse = params["embeddings"].astype(jnp.float32)
        for s in ses[:0:-1]:                                  # coarse -> level 1 (tiny)
            w_coarse = jax.nn.softmax(s.astype(jnp.float32), axis=1) @ w_coarse
        w_coarse = w_coarse.astype(jnp.bfloat16)
        s_fine = ses[0].astype(jnp.float32)                   # rows scale with num_nodes
        in_specs += [
            pl.BlockSpec((tm, s_fine.shape[1]), lambda i: (i, 0)),  # row-tiled stream
            pl.BlockSpec(w_coarse.shape, lambda i: (0, 0)),         # resident
        ]
        args += [s_fine, w_coarse]

    out_shape = (
        jax.ShapeDtypeStruct((n, num_classes), jnp.float32),
        jax.ShapeDtypeStruct((n, lat_dim), jnp.float32),
    )
    out_specs = (
        pl.BlockSpec((tm, num_classes), lambda i: (i, 0)),
        pl.BlockSpec((tm, lat_dim), lambda i: (i, 0)),
    )

    cls_out, lat_out = pl.pallas_call(
        _make_kernel(has_unpool, num_classes),
        out_shape=out_shape,
        grid=grid,
        in_specs=in_specs,
        out_specs=out_specs,
        compiler_params=pltpu.CompilerParams(
            dimension_semantics=("parallel",),     # v7x: shard row grid across 2 TCs
            vmem_limit_bytes=32 * 1024 * 1024,     # safe within v7x's 64 MiB VMEM
        ),
    )(*args)
    return cls_out, lat_out


# ----------------------------- pure-JAX reference -----------------------------
def _reference_forward(x, ses, params, num_classes):
    h = jnp.maximum(x @ params["w1"] + params["b1"].reshape(1, -1), 0.0)
    y = jnp.maximum(h @ params["w2"] + params["b2"].reshape(1, -1), 0.0)
    if ses is not None and len(ses) > 0:
        w = params["embeddings"]
        for s in ses[::-1]:
            w = jax.nn.softmax(s, axis=1) @ w
        y = y + w
    return y[:, :num_classes], y[:, num_classes:]


if __name__ == "__main__":
    # Hyper-params implied by __init__ (small test sizes).
    num_nodes, density = 64, 0.25
    num_features, hidden_dim = 32, 32
    num_classes, L_dim = 4, 12
    out_dim = num_classes + L_dim
    k_nodes = ceil(num_nodes * density)            # = 16

    key = jax.random.PRNGKey(0)
    keys = jax.random.split(key, 8)

    x = jax.random.normal(keys[0], (num_nodes, num_features), jnp.float32)
    adj = jax.random.normal(keys[1], (num_nodes, num_nodes), jnp.float32)
    # Assignment matrices, fine -> coarse: [64 -> 32], [32 -> k_nodes]
    s0 = jax.random.normal(keys[2], (num_nodes, 32), jnp.float32)
    s1 = jax.random.normal(keys[3], (32, k_nodes), jnp.float32)
    ses = [s0, s1]

    # Parameters (deterministic, in-script)
    emb0 = jax.random.normal(keys[4], (k_nodes, out_dim), jnp.float32)
    q, _ = jnp.linalg.qr(emb0.T)                   # mimic nn.init.orthogonal_
    embeddings = q.T[:k_nodes, :out_dim].astype(jnp.float32)
    w1 = jax.random.normal(keys[5], (num_features, hidden_dim), jnp.float32) * 0.1
    b1 = jax.random.normal(keys[6], (1, hidden_dim), jnp.float32) * 0.1
    w2 = jax.random.normal(keys[7], (hidden_dim, out_dim), jnp.float32) * 0.1
    b2 = jnp.zeros((1, out_dim), jnp.float32)
    params = dict(w1=w1, b1=b1, w2=w2, b2=b2, embeddings=embeddings)

    # Full path (MLP + fused finest-level unpool residual); 2-step row grid.
    cls_out, lat_out = mlp_classifier_forward(x, adj, ses, params, num_classes)
    jax.block_until_ready((cls_out, lat_out))
    assert cls_out.shape == (num_nodes, num_classes)
    assert lat_out.shape == (num_nodes, L_dim)
    rc, rl = _reference_forward(x, ses, params, num_classes)
    np.testing.assert_allclose(np.asarray(cls_out), np.asarray(rc), rtol=5e-2, atol=5e-2)
    np.testing.assert_allclose(np.asarray(lat_out), np.asarray(rl), rtol=5e-2, atol=5e-2)

    # ses=None path (pure MLP head).
    cls2, lat2 = mlp_classifier_forward(x, adj, None, params, num_classes)
    jax.block_until_ready((cls2, lat2))
    rc2, rl2 = _reference_forward(x, None, params, num_classes)
    np.testing.assert_allclose(np.asarray(cls2), np.asarray(rc2), rtol=5e-2, atol=5e-2)
    np.testing.assert_allclose(np.asarray(lat2), np.asarray(rl2), rtol=5e-2, atol=5e-2)

    print("KERNEL_OK")
</pallas_src>

<mosaic_0001>
module attributes {stable_mosaic.version = 11 : i64} {
  func.func @kernel(%arg0: i32, %arg1: memref<32x32xbf16, #tpu.memory_space<vmem>>, %arg2: memref<32x32xbf16, #tpu.memory_space<vmem>>, %arg3: memref<1x32xf32, #tpu.memory_space<vmem>>, %arg4: memref<32x16xbf16, #tpu.memory_space<vmem>>, %arg5: memref<1x16xf32, #tpu.memory_space<vmem>>, %arg6: memref<32x32xf32, #tpu.memory_space<vmem>>, %arg7: memref<32x16xbf16, #tpu.memory_space<vmem>>, %arg8: memref<32x4xf32, #tpu.memory_space<vmem>>, %arg9: memref<32x12xf32, #tpu.memory_space<vmem>>) attributes {dimension_semantics = [#tpu.dimension_semantics<parallel>], iteration_bounds = array<i64: 2>, scalar_prefetch = 0 : i64, scratch_operands = 0 : i64, tpu.core_type = #tpu.core_type<tc>, window_params = [{transform_indices = @transform_0, window_bounds = array<i64: 32, 32>}, {pipeline_mode = #tpu.pipeline_mode<synchronous>, transform_indices = @transform_1, window_bounds = array<i64: 32, 32>}, {pipeline_mode = #tpu.pipeline_mode<synchronous>, transform_indices = @transform_2, window_bounds = array<i64: 1, 32>}, {pipeline_mode = #tpu.pipeline_mode<synchronous>, transform_indices = @transform_3, window_bounds = array<i64: 32, 16>}, {pipeline_mode = #tpu.pipeline_mode<synchronous>, transform_indices = @transform_4, window_bounds = array<i64: 1, 16>}, {transform_indices = @transform_5, window_bounds = array<i64: 32, 32>}, {pipeline_mode = #tpu.pipeline_mode<synchronous>, transform_indices = @transform_6, window_bounds = array<i64: 32, 16>}, {transform_indices = @transform_7, window_bounds = array<i64: 32, 4>}, {transform_indices = @transform_8, window_bounds = array<i64: 32, 12>}]} {
    %c0 = arith.constant 0 : index
    %c0_0 = arith.constant 0 : index
    %0 = vector.load %arg1[%c0, %c0_0] : memref<32x32xbf16, #tpu.memory_space<vmem>>, vector<32x32xbf16>
    %c0_1 = arith.constant 0 : index
    %c0_2 = arith.constant 0 : index
    %1 = vector.load %arg2[%c0_1, %c0_2] : memref<32x32xbf16, #tpu.memory_space<vmem>>, vector<32x32xbf16>
    %cst = arith.constant dense<0.000000e+00> : vector<32x32xf32>
    %2 = tpu.matmul %0, %1, %cst {dimension_numbers = #tpu.dot_dimension_numbers<[1], [0], [0], [1], [0, 0, 1, 1], [], []>} : vector<32x32xbf16>, vector<32x32xbf16>, vector<32x32xf32> -> vector<32x32xf32>
    %c0_3 = arith.constant 0 : index
    %c0_4 = arith.constant 0 : index
    %3 = vector.load %arg3[%c0_3, %c0_4] : memref<1x32xf32, #tpu.memory_space<vmem>>, vector<1x32xf32>
    %4 = vector.broadcast %3 : vector<1x32xf32> to vector<32x32xf32>
    %5 = arith.addf %2, %4 : vector<32x32xf32>
    %cst_5 = arith.constant 0.000000e+00 : f32
    %6 = vector.broadcast %cst_5 : f32 to vector<32x32xf32>
    %7 = arith.maximumf %5, %6 : vector<32x32xf32>
    %8 = arith.truncf %7 : vector<32x32xf32> to vector<32x32xbf16>
    %c0_6 = arith.constant 0 : index
    %c0_7 = arith.constant 0 : index
    %9 = vector.load %arg4[%c0_6, %c0_7] : memref<32x16xbf16, #tpu.memory_space<vmem>>, vector<32x16xbf16>
    %cst_8 = arith.constant dense<0.000000e+00> : vector<32x16xf32>
    %10 = tpu.matmul %8, %9, %cst_8 {dimension_numbers = #tpu.dot_dimension_numbers<[1], [0], [0], [1], [0, 0, 1, 1], [], []>} : vector<32x32xbf16>, vector<32x16xbf16>, vector<32x16xf32> -> vector<32x16xf32>
    %c0_9 = arith.constant 0 : index
    %c0_10 = arith.constant 0 : index
    %11 = vector.load %arg5[%c0_9, %c0_10] : memref<1x16xf32, #tpu.memory_space<vmem>>, vector<1x16xf32>
    %12 = vector.broadcast %11 : vector<1x16xf32> to vector<32x16xf32>
    %13 = arith.addf %10, %12 : vector<32x16xf32>
    %cst_11 = arith.constant 0.000000e+00 : f32
    %14 = vector.broadcast %cst_11 : f32 to vector<32x16xf32>
    %15 = arith.maximumf %13, %14 : vector<32x16xf32>
    %c0_12 = arith.constant 0 : index
    %c0_13 = arith.constant 0 : index
    %16 = vector.load %arg6[%c0_12, %c0_13] : memref<32x32xf32, #tpu.memory_space<vmem>>, vector<32x32xf32>
    %cst_14 = arith.constant dense<0xFF800000> : vector<32xf32>
    %17 = vector.multi_reduction <maximumf>, %16, %cst_14 [1] : vector<32x32xf32> to vector<32xf32>
    %18 = vector.shape_cast %17 : vector<32xf32> to vector<32x1xf32>
    %19 = vector.broadcast %18 : vector<32x1xf32> to vector<32x32xf32>
    %20 = arith.subf %16, %19 : vector<32x32xf32>
    %21 = math.exp %20 : vector<32x32xf32>
    %cst_15 = arith.constant dense<0.000000e+00> : vector<32xf32>
    %22 = vector.multi_reduction <add>, %21, %cst_15 [1] : vector<32x32xf32> to vector<32xf32>
    %23 = vector.shape_cast %22 : vector<32xf32> to vector<32x1xf32>
    %24 = tpu.reciprocal %23 {approx = true} : vector<32x1xf32> -> vector<32x1xf32>
    %25 = vector.broadcast %24 : vector<32x1xf32> to vector<32x32xf32>
    %26 = arith.mulf %21, %25 : vector<32x32xf32>
    %27 = arith.truncf %26 : vector<32x32xf32> to vector<32x32xbf16>
    %c0_16 = arith.constant 0 : index
    %c0_17 = arith.constant 0 : index
    %28 = vector.load %arg7[%c0_16, %c0_17] : memref<32x16xbf16, #tpu.memory_space<vmem>>, vector<32x16xbf16>
    %cst_18 = arith.constant dense<0.000000e+00> : vector<32x16xf32>
    %29 = tpu.matmul %27, %28, %cst_18 {dimension_numbers = #tpu.dot_dimension_numbers<[1], [0], [0], [1], [0, 0, 1, 1], [], []>} : vector<32x32xbf16>, vector<32x16xbf16>, vector<32x16xf32> -> vector<32x16xf32>
    %30 = arith.addf %15, %29 : vector<32x16xf32>
    %31 = vector.extract_strided_slice %30 {offsets = [0, 0], sizes = [32, 4], strides = [1, 1]} : vector<32x16xf32> to vector<32x4xf32>
    %c0_19 = arith.constant 0 : index
    %c0_20 = arith.constant 0 : index
    %32 = vector.load %arg8[%c0_19, %c0_20] : memref<32x4xf32, #tpu.memory_space<vmem>>, vector<32x4xf32>
    tpu.vector_store %arg8[%c0_19, %c0_20], %31 {strides = array<i32>} : memref<32x4xf32, #tpu.memory_space<vmem>>, vector<32x4xf32>,
    %33 = vector.extract_strided_slice %30 {offsets = [0, 4], sizes = [32, 12], strides = [1, 1]} : vector<32x16xf32> to vector<32x12xf32>
    %c0_21 = arith.constant 0 : index
    %c0_22 = arith.constant 0 : index
    %34 = vector.load %arg9[%c0_21, %c0_22] : memref<32x12xf32, #tpu.memory_space<vmem>>, vector<32x12xf32>
    tpu.vector_store %arg9[%c0_21, %c0_22], %33 {strides = array<i32>} : memref<32x12xf32, #tpu.memory_space<vmem>>, vector<32x12xf32>,
    return
  }
  func.func @transform_0(%arg0: i32) -> (i32, i32) {
    %c0_i32 = arith.constant 0 : i32
    %c0_i32_0 = arith.constant 0 : i32
    return %arg0, %c0_i32 : i32, i32
  }
  func.func @transform_1(%arg0: i32) -> (i32, i32) {
    %c0_i32 = arith.constant 0 : i32
    %c0_i32_0 = arith.constant 0 : i32
    %c0_i32_1 = arith.constant 0 : i32
    return %c0_i32, %c0_i32_0 : i32, i32
  }
  func.func @transform_2(%arg0: i32) -> (i32, i32) {
    %c0_i32 = arith.constant 0 : i32
    %c0_i32_0 = arith.constant 0 : i32
    %c0_i32_1 = arith.constant 0 : i32
    return %c0_i32, %c0_i32_0 : i32, i32
  }
  func.func @transform_3(%arg0: i32) -> (i32, i32) {
    %c0_i32 = arith.constant 0 : i32
    %c0_i32_0 = arith.constant 0 : i32
    %c0_i32_1 = arith.constant 0 : i32
    return %c0_i32, %c0_i32_0 : i32, i32
  }
  func.func @transform_4(%arg0: i32) -> (i32, i32) {
    %c0_i32 = arith.constant 0 : i32
    %c0_i32_0 = arith.constant 0 : i32
    %c0_i32_1 = arith.constant 0 : i32
    return %c0_i32, %c0_i32_0 : i32, i32
  }
  func.func @transform_5(%arg0: i32) -> (i32, i32) {
    %c0_i32 = arith.constant 0 : i32
    %c0_i32_0 = arith.constant 0 : i32
    return %arg0, %c0_i32 : i32, i32
  }
  func.func @transform_6(%arg0: i32) -> (i32, i32) {
    %c0_i32 = arith.constant 0 : i32
    %c0_i32_0 = arith.constant 0 : i32
    %c0_i32_1 = arith.constant 0 : i32
    return %c0_i32, %c0_i32_0 : i32, i32
  }
  func.func @transform_7(%arg0: i32) -> (i32, i32) {
    %c0_i32 = arith.constant 0 : i32
    %c0_i32_0 = arith.constant 0 : i32
    return %arg0, %c0_i32 : i32, i32
  }
  func.func @transform_8(%arg0: i32) -> (i32, i32) {
    %c0_i32 = arith.constant 0 : i32
    %c0_i32_0 = arith.constant 0 : i32
    return %arg0, %c0_i32 : i32, i32
  }
}

</mosaic_0001>

<llo_original>
// kernel: tpu_custom_call.1
$region0: #{tpu_custom_call.1}
  #allocation0 [shape = 'u32[]', space=smem, size = 0x4, offset = 0x4, fixed_abs, tag = 'smem constant byte address 0x4 - core index']
  #allocation1 [shape = 'u32[144,128]{1,0:T(1,128)}', space=vmem, size = 0x12000, scoped, tag = 'internal scratch']
  %s0 = inlined_call_operand.vmem [shape: bf16[64,32], index: 0, kind: input, shape index: {}]
  %s1 = inlined_call_operand.vmem [shape: bf16[32,32], index: 1, kind: input, shape index: {}]
  %s2 = inlined_call_operand.vmem [shape: f32[1,32], index: 2, kind: input, shape index: {}]
  %s3 = inlined_call_operand.vmem [shape: bf16[32,16], index: 3, kind: input, shape index: {}]
  %s4 = inlined_call_operand.vmem [shape: f32[1,16], index: 4, kind: input, shape index: {}]
  %s5 = inlined_call_operand.vmem [shape: f32[64,32], index: 5, kind: input, shape index: {}]
  %s6 = inlined_call_operand.vmem [shape: bf16[32,16], index: 6, kind: input, shape index: {}]
  %s7 = inlined_call_operand.vmem [shape: f32[64,4], index: 7, kind: output, shape index: {0}]
  %s8 = inlined_call_operand.vmem [shape: f32[64,12], index: 8, kind: output, shape index: {1}]
  %9 = xla_tuple %s7, %s8
  %s10 = sld [smem:[#allocation0]]
  $region69: #{tpu_custom_call.1} parent=0
    _
  %s12 = ssub.s32 1, %s10
  %s13 = scalar_select 0, %s12, %s10
  loop: start=0, step=1, limit=4
  $region2: #{tpu_custom_call.1} parent=0 // loop_pre_header
    _
  $region3: #{tpu_custom_call.1} parent=0 // loop_header
    %s15 = sphi 0, %s19
    %p16 = scmp.ge.s32.totalorder %s15, 4
    %s25 = sphi 0, %s27
    %s28 = sphi 0, %s25
    %s29 = sphi 0, %s28
    %s45 = sphi 0, %s29
    %s49 = sphi 0, %s49
    %s51 = sphi 0, %s49
    %s52 = sphi 0, %s51
    %s66 = sphi 0, %s52
    %s70 = sphi 0, %s70
    %s72 = sphi 0, %s70
    %s73 = sphi 0, %s72
    %s87 = sphi 0, %s73
    %s91 = sphi 0, %s91
    %s93 = sphi 0, %s91
    %s94 = sphi 0, %s93
    %s108 = sphi 0, %s94
    %s112 = sphi 0, %s112
    %s114 = sphi 0, %s112
    %s115 = sphi 0, %s114
    %s129 = sphi 0, %s115
    %s135 = sphi 0, %s137
    %s138 = sphi 0, %s135
    %s139 = sphi 0, %s138
    %s155 = sphi 0, %s139
    %s159 = sphi 0, %s159
    %s161 = sphi 0, %s159
    %s162 = sphi 0, %s161
    %s176 = sphi 0, %s162
    %s182 = sphi 0, %s184
    %s185 = sphi 0, %s182
    %s186 = sphi 0, %s185
    %s202 = sphi 0, %s186
    %s208 = sphi 0, %s210
    %s211 = sphi 0, %s208
    %s212 = sphi 0, %s211
    %s228 = sphi 0, %s212
  $region4: #{tpu_custom_call.1} parent=0 // loop_header_branch
    %18 = sbr.rel (%p16) target = $region8
  $region5: #{tpu_custom_call.1} parent=0 // loop_body
    %s20 = ssub.s32 %s15, 1
    %s21 = ssub.s32 %s15, 2
    %s22 = sadd.s32 %s15, 1
    %s23 = ssub.s32 %s15, %s22
    %p24 = scmp.eq.s32.totalorder %s23, 0
    %s26 = sadd.s32 %s25, 1
    %s27 = scalar_select %p24, %s25, %s26
    %p30 = pneg %p24
    %p31 = scmp.eq.s32.totalorder %s15, 1
    %p32 = por %p30, %p31
    %p33 = scmp.ne.s32.totalorder %s25, %s28
    %p34 = scmp.eq.s32.totalorder %s15, 0
    %p35 = por %p33, %p34
    %p36 = scmp.ne.s32.totalorder %s25, %s28
    %p37 = scmp.eq.s32.totalorder %s20, 1
    %p38 = por %p36, %p37
    %p39 = scmp.ne.s32.totalorder %s28, %s29
    %p40 = scmp.eq.s32.totalorder %s20, 0
    %p41 = por %p39, %p40
    %p42 = scmp.ne.s32.totalorder %s28, %s29
    %p43 = scmp.eq.s32.totalorder %s21, 1
    %p44 = por %p42, %p43
    %p46 = scmp.ne.s32.totalorder %s29, %s45
    %p47 = scmp.eq.s32.totalorder %s21, 0
    %p48 = por %p46, %p47
    %s50 = sadd.s32 %s49, 1
    %p53 = scmp.eq.s32.totalorder %s15, 1
    %p54 = scmp.ne.s32.totalorder %s49, %s51
    %p55 = scmp.eq.s32.totalorder %s15, 0
    %p56 = por %p54, %p55
    %p57 = scmp.ne.s32.totalorder %s49, %s51
    %p58 = scmp.eq.s32.totalorder %s20, 1
    %p59 = por %p57, %p58
    %p60 = scmp.ne.s32.totalorder %s51, %s52
    %p61 = scmp.eq.s32.totalorder %s20, 0
    %p62 = por %p60, %p61
    %p63 = scmp.ne.s32.totalorder %s51, %s52
    %p64 = scmp.eq.s32.totalorder %s21, 1
    %p65 = por %p63, %p64
    %p67 = scmp.ne.s32.totalorder %s52, %s66
    %p68 = scmp.eq.s32.totalorder %s21, 0
    %p69 = por %p67, %p68
    %s71 = sadd.s32 %s70, 1
    %p74 = scmp.eq.s32.totalorder %s15, 1
    %p75 = scmp.ne.s32.totalorder %s70, %s72
    %p76 = scmp.eq.s32.totalorder %s15, 0
    %p77 = por %p75, %p76
    %p78 = scmp.ne.s32.totalorder %s70, %s72
    %p79 = scmp.eq.s32.totalorder %s20, 1
    %p80 = por %p78, %p79
    %p81 = scmp.ne.s32.totalorder %s72, %s73
    %p82 = scmp.eq.s32.totalorder %s20, 0
    %p83 = por %p81, %p82
    %p84 = scmp.ne.s32.totalorder %s72, %s73
    %p85 = scmp.eq.s32.totalorder %s21, 1
    %p86 = por %p84, %p85
    %p88 = scmp.ne.s32.totalorder %s73, %s87
    %p89 = scmp.eq.s32.totalorder %s21, 0
    %p90 = por %p88, %p89
    %s92 = sadd.s32 %s91, 1
    %p95 = scmp.eq.s32.totalorder %s15, 1
    %p96 = scmp.ne.s32.totalorder %s91, %s93
    %p97 = scmp.eq.s32.totalorder %s15, 0
    %p98 = por %p96, %p97
    %p99 = scmp.ne.s32.totalorder %s91, %s93
    %p100 = scmp.eq.s32.totalorder %s20, 1
    %p101 = por %p99, %p100
    %p102 = scmp.ne.s32.totalorder %s93, %s94
    %p103 = scmp.eq.s32.totalorder %s20, 0
    %p104 = por %p102, %p103
    %p105 = scmp.ne.s32.totalorder %s93, %s94
    %p106 = scmp.eq.s32.totalorder %s21, 1
    %p107 = por %p105, %p106
    %p109 = scmp.ne.s32.totalorder %s94, %s108
    %p110 = scmp.eq.s32.totalorder %s21, 0
    %p111 = por %p109, %p110
    %s113 = sadd.s32 %s112, 1
    %p116 = scmp.eq.s32.totalorder %s15, 1
    %p117 = scmp.ne.s32.totalorder %s112, %s114
    %p118 = scmp.eq.s32.totalorder %s15, 0
    %p119 = por %p117, %p118
    %p120 = scmp.ne.s32.totalorder %s112, %s114
    %p121 = scmp.eq.s32.totalorder %s20, 1
    %p122 = por %p120, %p121
    %p123 = scmp.ne.s32.totalorder %s114, %s115
    %p124 = scmp.eq.s32.totalorder %s20, 0
    %p125 = por %p123, %p124
    %p126 = scmp.ne.s32.totalorder %s114, %s115
    %p127 = scmp.eq.s32.totalorder %s21, 1
    %p128 = por %p126, %p127
    %p130 = scmp.ne.s32.totalorder %s115, %s129
    %p131 = scmp.eq.s32.totalorder %s21, 0
    %p132 = por %p130, %p131
    %s133 = ssub.s32 %s15, %s22
    %p134 = scmp.eq.s32.totalorder %s133, 0
    %s136 = sadd.s32 %s135, 1
    %s137 = scalar_select %p134, %s135, %s136
    %p140 = pneg %p134
    %p141 = scmp.eq.s32.totalorder %s15, 1
    %p142 = por %p140, %p141
    %p143 = scmp.ne.s32.totalorder %s135, %s138
    %p144 = scmp.eq.s32.totalorder %s15, 0
    %p145 = por %p143, %p144
    %p146 = scmp.ne.s32.totalorder %s135, %s138
    %p147 = scmp.eq.s32.totalorder %s20, 1
    %p148 = por %p146, %p147
    %p149 = scmp.ne.s32.totalorder %s138, %s139
    %p150 = scmp.eq.s32.totalorder %s20, 0
    %p151 = por %p149, %p150
    %p152 = scmp.ne.s32.totalorder %s138, %s139
    %p153 = scmp.eq.s32.totalorder %s21, 1
    %p154 = por %p152, %p153
    %p156 = scmp.ne.s32.totalorder %s139, %s155
    %p157 = scmp.eq.s32.totalorder %s21, 0
    %p158 = por %p156, %p157
    %s160 = sadd.s32 %s159, 1
    %p163 = scmp.eq.s32.totalorder %s15, 1
    %p164 = scmp.ne.s32.totalorder %s159, %s161
    %p165 = scmp.eq.s32.totalorder %s15, 0
    %p166 = por %p164, %p165
    %p167 = scmp.ne.s32.totalorder %s159, %s161
    %p168 = scmp.eq.s32.totalorder %s20, 1
    %p169 = por %p167, %p168
    %p170 = scmp.ne.s32.totalorder %s161, %s162
    %p171 = scmp.eq.s32.totalorder %s20, 0
    %p172 = por %p170, %p171
    %p173 = scmp.ne.s32.totalorder %s161, %s162
    %p174 = scmp.eq.s32.totalorder %s21, 1
    %p175 = por %p173, %p174
    %p177 = scmp.ne.s32.totalorder %s162, %s176
    %p178 = scmp.eq.s32.totalorder %s21, 0
    %p179 = por %p177, %p178
    %s180 = ssub.s32 %s15, %s22
    %p181 = scmp.eq.s32.totalorder %s180, 0
    %s183 = sadd.s32 %s182, 1
    %s184 = scalar_select %p181, %s182, %s183
    %p187 = pneg %p181
    %p188 = scmp.eq.s32.totalorder %s15, 1
    %p189 = por %p187, %p188
    %p190 = scmp.ne.s32.totalorder %s182, %s185
    %p191 = scmp.eq.s32.totalorder %s15, 0
    %p192 = por %p190, %p191
    %p193 = scmp.ne.s32.totalorder %s182, %s185
    %p194 = scmp.eq.s32.totalorder %s20, 1
    %p195 = por %p193, %p194
    %p196 = scmp.ne.s32.totalorder %s185, %s186
    %p197 = scmp.eq.s32.totalorder %s20, 0
    %p198 = por %p196, %p197
    %p199 = scmp.ne.s32.totalorder %s185, %s186
    %p200 = scmp.eq.s32.totalorder %s21, 1
    %p201 = por %p199, %p200
    %p203 = scmp.ne.s32.totalorder %s186, %s202
    %p204 = scmp.eq.s32.totalorder %s21, 0
    %p205 = por %p203, %p204
    %s206 = ssub.s32 %s15, %s22
    %p207 = scmp.eq.s32.totalorder %s206, 0
    %s209 = sadd.s32 %s208, 1
    %s210 = scalar_select %p207, %s208, %s209
    %p213 = pneg %p207
    %p214 = scmp.eq.s32.totalorder %s15, 1
    %p215 = por %p213, %p214
    %p216 = scmp.ne.s32.totalorder %s208, %s211
    %p217 = scmp.eq.s32.totalorder %s15, 0
    %p218 = por %p216, %p217
    %p219 = scmp.ne.s32.totalorder %s208, %s211
    %p220 = scmp.eq.s32.totalorder %s20, 1
    %p221 = por %p219, %p220
    %p222 = scmp.ne.s32.totalorder %s211, %s212
    %p223 = scmp.eq.s32.totalorder %s20, 0
    %p224 = por %p222, %p223
    %p225 = scmp.ne.s32.totalorder %s211, %s212
    %p226 = scmp.eq.s32.totalorder %s21, 1
    %p227 = por %p225, %p226
    %p229 = scmp.ne.s32.totalorder %s212, %s228
    %p230 = scmp.eq.s32.totalorder %s21, 0
    %p231 = por %p229, %p230
    %p232 = scmp.le.s32.totalorder 1, %s15
    %p233 = scmp.lt.s32.totalorder %s15, 3
    %p234 = pnand %p232, %p233
    %p235 = pneg %p234
    // Predicated region
    $region9: #{tpu_custom_call.1} parent=5 // pred_check
      _
    $region10: #{tpu_custom_call.1} parent=5 // pred_check_branch
      %237 = sbr.rel (%p234) target = $region12
    $region11: #{tpu_custom_call.1} parent=5 // pred_region
      %s238 = ssub.s32 %s15, 1
      // Predicated region
      $region13: #{tpu_custom_call.1} parent=11 // pred_check
        %p239 = pneg %p62
      $region14: #{tpu_custom_call.1} parent=11 // pred_check_branch
        %241 = sbr.rel (%p239) target = $region16
      $region15: #{tpu_custom_call.1} parent=11 // pred_region
        _
      $region16: #{tpu_custom_call.1} parent=11 // pred_fallthru
        _
      // Predicated region
      $region17: #{tpu_custom_call.1} parent=11 // pred_check
        %p242 = pneg %p83
      $region18: #{tpu_custom_call.1} parent=11 // pred_check_branch
        %244 = sbr.rel (%p242) target = $region20
      $region19: #{tpu_custom_call.1} parent=11 // pred_region
        _
      $region20: #{tpu_custom_call.1} parent=11 // pred_fallthru
        _
      // Predicated region
      $region21: #{tpu_custom_call.1} parent=11 // pred_check
        %p245 = pneg %p104
      $region22: #{tpu_custom_call.1} parent=11 // pred_check_branch
        %247 = sbr.rel (%p245) target = $region24
      $region23: #{tpu_custom_call.1} parent=11 // pred_region
        _
      $region24: #{tpu_custom_call.1} parent=11 // pred_fallthru
        _
      // Predicated region
      $region25: #{tpu_custom_call.1} parent=11 // pred_check
        %p248 = pneg %p125
      $region26: #{tpu_custom_call.1} parent=11 // pred_check_branch
        %250 = sbr.rel (%p248) target = $region28
      $region27: #{tpu_custom_call.1} parent=11 // pred_region
        _
      $region28: #{tpu_custom_call.1} parent=11 // pred_fallthru
        _
      // Predicated region
      $region29: #{tpu_custom_call.1} parent=11 // pred_check
        %p251 = pneg %p172
      $region30: #{tpu_custom_call.1} parent=11 // pred_check_branch
        %253 = sbr.rel (%p251) target = $region32
      $region31: #{tpu_custom_call.1} parent=11 // pred_region
        _
      $region32: #{tpu_custom_call.1} parent=11 // pred_fallthru
        _
    $region12: #{tpu_custom_call.1} parent=5 // pred_fallthru
      _
    %p254 = scmp.lt.s32.totalorder %s15, 2
    // Predicated region
    $region33: #{tpu_custom_call.1} parent=5 // pred_check
      %p255 = pneg %p254
    $region34: #{tpu_custom_call.1} parent=5 // pred_check_branch
      %257 = sbr.rel (%p255) target = $region36
    $region35: #{tpu_custom_call.1} parent=5 // pred_region
      // Predicated region
      $region37: #{tpu_custom_call.1} parent=35 // pred_check
        %p258 = pneg %p35
      $region38: #{tpu_custom_call.1} parent=35 // pred_check_branch
        %260 = sbr.rel (%p258) target = $region40
      $region39: #{tpu_custom_call.1} parent=35 // pred_region
        %s261 = smul.u32 4, %s15
        %p262 = scmp.lt.s32.totalorder %s261, 7
        %s263 = scalar_select %p262, %s261, 7
        %s264 = smul.addr %s263, 4
        %s265 = scalar_lea.vmem %s0, %s264
        %s266 = smul.u32 4, %s15
      $region40: #{tpu_custom_call.1} parent=35 // pred_fallthru
        _
      // Predicated region
      $region41: #{tpu_custom_call.1} parent=35 // pred_check
        %p267 = pneg %p145
      $region42: #{tpu_custom_call.1} parent=35 // pred_check_branch
        %269 = sbr.rel (%p267) target = $region44
      $region43: #{tpu_custom_call.1} parent=35 // pred_region
        %s270 = smul.u32 4, %s15
        %p271 = scmp.lt.s32.totalorder %s270, 7
        %s272 = scalar_select %p271, %s270, 7
        %s273 = smul.addr %s272, 8
        %s274 = scalar_lea.vmem %s5, %s273
        %s275 = smul.u32 4, %s15
      $region44: #{tpu_custom_call.1} parent=35 // pred_fallthru
        _
    $region36: #{tpu_custom_call.1} parent=5 // pred_fallthru
      _
    %p276 = scmp.le.s32.totalorder 1, %s15
    %p277 = scmp.lt.s32.totalorder %s15, 3
    %p278 = pnand %p276, %p277
    %p279 = pneg %p278
    // Predicated region
    $region45: #{tpu_custom_call.1} parent=5 // pred_check
      _
    $region46: #{tpu_custom_call.1} parent=5 // pred_check_branch
      %281 = sbr.rel (%p278) target = $region48
    $region47: #{tpu_custom_call.1} parent=5 // pred_region
      %s282 = ssub.s32 %s15, 1
      %s283 = smul.u32 4, %s20
      %p284 = scmp.lt.s32.totalorder %s283, 7
      %s285 = scalar_select %p284, %s283, 7
      %s286 = smul.addr %s285, 4
      %s287 = scalar_lea.vmem %s0, %s286
      %p288 = pneg %p41
      %p289 = pneg %p38
      %p290 = pneg %p62
      %p291 = pneg %p59
      %p292 = pneg %p83
      %p293 = pneg %p80
      %p294 = pneg %p104
      %p295 = pneg %p101
      %p296 = pneg %p125
      %p297 = pneg %p122
      %s298 = smul.u32 4, %s20
      %p299 = scmp.lt.s32.totalorder %s298, 7
      %s300 = scalar_select %p299, %s298, 7
      %s301 = smul.addr %s300, 8
      %s302 = scalar_lea.vmem %s5, %s301
      %p303 = pneg %p151
      %p304 = pneg %p148
      %p305 = pneg %p172
      %p306 = pneg %p169
      %p307 = pneg %p198
      %p308 = pneg %p195
      %s309 = smul.u32 4, %s20
      %p310 = scmp.lt.s32.totalorder %s309, 7
      %s311 = scalar_select %p310, %s309, 7
      %s312 = smul.addr %s311, 8
      %s313 = scalar_lea.vmem %s7, %s312
      %p314 = pneg %p224
      %p315 = pneg %p221
      %s316 = smul.u32 4, %s20
      %p317 = scmp.lt.s32.totalorder %s316, 7
      %s318 = scalar_select %p317, %s316, 7
      %s319 = smul.addr %s318, 8
      %s320 = scalar_lea.vmem %s8, %s319
      %s321 = smul.u32 4, %s20
      %p322 = scmp.lt.s32.totalorder %s321, 7
      %s323 = scalar_select %p322, %s321, 7
      %s324 = smul.addr %s323, 4
      %s325 = scalar_lea.vmem %s0, %s324
      %s326 = smul.u32 4, %s20
      %s327 = smul.u32 4, %s20
      %p328 = scmp.lt.s32.totalorder %s327, 7
      %s329 = scalar_select %p328, %s327, 7
      %s330 = smul.addr %s329, 8
      %s331 = scalar_lea.vmem %s5, %s330
      %s332 = smul.u32 4, %s20
      %s333 = smul.u32 4, %s20
      %p334 = scmp.lt.s32.totalorder %s333, 7
      %s335 = scalar_select %p334, %s333, 7
      %s336 = smul.addr %s335, 8
      %s337 = scalar_lea.vmem %s7, %s336
      %s338 = smul.u32 4, %s20
      %s339 = smul.u32 4, %s20
      %p340 = scmp.lt.s32.totalorder %s339, 7
      %s341 = scalar_select %p340, %s339, 7
      %s342 = smul.addr %s341, 8
      %s343 = scalar_lea.vmem %s8, %s342
      %s344 = smul.u32 4, %s20
      %v346 = vld [vmem:[%s325] sm:$0xf]
      %v347 = vld [vmem:[%s325 + $0x4] sm:$0xf]
      %v348 = vld [vmem:[%s325 + $0x8] sm:$0xf]
      %v349 = vld [vmem:[%s325 + $0xc] sm:$0xf]
      %v350 = vld [vmem:[%s1] sm:$0xf]
      %v351 = vld [vmem:[%s1 + $0x4] sm:$0xf]
      %v352 = vld [vmem:[%s1 + $0x8] sm:$0xf]
      %v353 = vld [vmem:[%s1 + $0xc] sm:$0xf]
      %v354 = vld [vmem:[%s2] sm:$0x1]
      %v356 = vlaneseq
      %v357 = vshrl.u32 %v356, 7
      %v358 = vsub.s32 0, %v357
      %v359 = vrot.slane %v354, %v358
      %v365 = vunpack.c.l.b16 %v346
      %v366 = vunpack.c.l.b16 %v347
      %v367 = vunpack.c.l.b16 %v348
      %v368 = vunpack.c.l.b16 %v349
      %v369 = vpack.c.b16 %v366, %v365
      %v370 = vpack.c.b16 %v368, %v367
      %v375 = vunpack.c.l.b16 %v350
      %v376 = vunpack.c.l.b16 %v351
      %v377 = vunpack.c.l.b16 %v352
      %v378 = vunpack.c.l.b16 %v353
      %v379 = vpack.c.b16 %v376, %v375
      %v380 = vpack.c.b16 %v378, %v377
      %vm383 = vcmask 261120
      %v385 = vsel %vm383, %v369, 0
      %v388 = vsel %vm383, %v370, 0
      %390 = vmatprep.subr.bf16.mxu0 0
      %391 = vmatpush1.bf16.msra.mxu0 0
      %392 = vmatprep.subr.bf16.mxu0 0
      %393 = vmatpush1.bf16.msra.mxu0 0
      %394 = vmatprep.subr.bf16.mxu0 0
      %395 = vmatpush1.bf16.msra.mxu0 0
      %396 = vmatprep.subr.bf16.mxu0 0
      %397 = vmatpush1.bf16.msra.mxu0 0
      %398 = vmatprep.subr.bf16.mxu0 0
      %399 = vmatpush1.bf16.msra.mxu0 0
      %400 = vmatprep.subr.bf16.mxu0 0
      %401 = vmatpush1.bf16.msra.mxu0 0
      %402 = vmatprep.subr.bf16.mxu0 0
      %403 = vmatpush1.bf16.msra.mxu0 %v380
      %404 = vmatprep.subr.bf16.mxu0 0
      %405 = vmatpush1.bf16.msra.mxu0 %v379
      %406 = vmatprep.subr.bf16.mxu0 0
      %407 = vmatpush2.bf16.msra.mxu0 0
      %408 = vmatprep.subr.bf16.mxu0 0
      %409 = vmatpush2.bf16.msra.mxu0 0
      %410 = vmatprep.subr.bf16.mxu0 0
      %411 = vmatpush2.bf16.msra.mxu0 0
      %412 = vmatprep.subr.bf16.mxu0 0
      %413 = vmatpush2.bf16.msra.mxu0 0
      %414 = vmatprep.subr.bf16.mxu0 0
      %415 = vmatpush2.bf16.msra.mxu0 0
      %416 = vmatprep.subr.bf16.mxu0 0
      %417 = vmatpush2.bf16.msra.mxu0 0
      %418 = vmatprep.subr.bf16.mxu0 0
      %419 = vmatpush2.bf16.msra.mxu0 0
      %420 = vmatprep.subr.bf16.mxu0 0
      %421 = vmatpush2.bf16.msra.mxu0 0
      %422 = vmatprep.mubr.bf16.mxu0 0
      %423 = vmatmul.mubr.bf16.gmra.mxu0 %v385
      %v424 = vpop.f32.mrf.mxu0
      %v425 = vadd.f32 %v359, %v424
      %v426 = vpop.f32.mrf.mxu0
      %v427 = vpop.f32.mrf.mxu0
      %v428 = vadd.f32 %v359, %v427
      %v429 = vpop.f32.mrf.mxu0
      %430 = vmatprep.mubr.bf16.mxu0 0
      %431 = vmatmul.mubr.bf16.gmra.mxu0 %v388
      %v432 = vpop.f32.mrf.mxu0
      %v433 = vadd.f32 %v359, %v432
      %v434 = vpop.f32.mrf.mxu0
      %v435 = vpop.f32.mrf.mxu0
      %v436 = vadd.f32 %v359, %v435
      %v437 = vpop.f32.mrf.mxu0
      %438 = vdwg.mxu0
      %v439 = vmax.f32 %v425, 0.0
      %v440 = vmax.f32 %v428, 0.0
      %v441 = vmax.f32 %v433, 0.0
      %v442 = vmax.f32 %v436, 0.0
      %v443 = vpack.c.bf16 %v440, %v439
      %v444 = vpack.c.bf16 %v442, %v441
      %v445 = vld [vmem:[%s3] sm:$0xf]
      %v446 = vld [vmem:[%s3 + $0x4] sm:$0xf]
      %v447 = vld [vmem:[%s3 + $0x8] sm:$0xf]
      %v448 = vld [vmem:[%s3 + $0xc] sm:$0xf]
      %v449 = vld [vmem:[%s4] sm:$0x1]
      %v451 = vlaneseq
      %v452 = vshrl.u32 %v451, 7
      %v453 = vsub.s32 0, %v452
      %v454 = vrot.slane %v449, %v453
      %v460 = vunpack.c.l.b16 %v445
      %v461 = vunpack.c.l.b16 %v446
      %v462 = vunpack.c.l.b16 %v447
      %v463 = vunpack.c.l.b16 %v448
      %v464 = vpack.c.b16 %v461, %v460
      %v465 = vpack.c.b16 %v463, %v462
      %v469 = vsel %vm383, %v443, 0
      %v472 = vsel %vm383, %v444, 0
      %474 = vmatprep.subr.bf16.mxu0 0
      %475 = vmatpush1.bf16.msra.mxu0 0
      %476 = vmatprep.subr.bf16.mxu0 0
      %477 = vmatpush1.bf16.msra.mxu0 0
      %478 = vmatprep.subr.bf16.mxu0 0
      %479 = vmatpush1.bf16.msra.mxu0 0
      %480 = vmatprep.subr.bf16.mxu0 0
      %481 = vmatpush1.bf16.msra.mxu0 0
      %482 = vmatprep.subr.bf16.mxu0 0
      %483 = vmatpush1.bf16.msra.mxu0 0
      %484 = vmatprep.subr.bf16.mxu0 0
      %485 = vmatpush1.bf16.msra.mxu0 0
      %486 = vmatprep.subr.bf16.mxu0 0
      %487 = vmatpush1.bf16.msra.mxu0 %v465
      %488 = vmatprep.subr.bf16.mxu0 0
      %489 = vmatpush1.bf16.msra.mxu0 %v464
      %490 = vmatprep.subr.bf16.mxu0 0
      %491 = vmatpush2.bf16.msra.mxu0 0
      %492 = vmatprep.subr.bf16.mxu0 0
      %493 = vmatpush2.bf16.msra.mxu0 0
      %494 = vmatprep.subr.bf16.mxu0 0
      %495 = vmatpush2.bf16.msra.mxu0 0
      %496 = vmatprep.subr.bf16.mxu0 0
      %497 = vmatpush2.bf16.msra.mxu0 0
      %498 = vmatprep.subr.bf16.mxu0 0
      %499 = vmatpush2.bf16.msra.mxu0 0
      %500 = vmatprep.subr.bf16.mxu0 0
      %501 = vmatpush2.bf16.msra.mxu0 0
      %502 = vmatprep.subr.bf16.mxu0 0
      %503 = vmatpush2.bf16.msra.mxu0 0
      %504 = vmatprep.subr.bf16.mxu0 0
      %505 = vmatpush2.bf16.msra.mxu0 0
      %506 = vmatprep.mubr.bf16.mxu0 0
      %507 = vmatmul.mubr.bf16.gmra.mxu0 %v469
      %v508 = vpop.f32.mrf.mxu0
      %v509 = vadd.f32 %v454, %v508
      %v510 = vpop.f32.mrf.mxu0
      %v511 = vpop.f32.mrf.mxu0
      %v512 = vadd.f32 %v454, %v511
      %v513 = vpop.f32.mrf.mxu0
      %514 = vmatprep.mubr.bf16.mxu0 0
      %515 = vmatmul.mubr.bf16.gmra.mxu0 %v472
      %v516 = vpop.f32.mrf.mxu0
      %v517 = vadd.f32 %v454, %v516
      %v518 = vpop.f32.mrf.mxu0
      %v519 = vpop.f32.mrf.mxu0
      %v520 = vadd.f32 %v454, %v519
      %v521 = vpop.f32.mrf.mxu0
      %522 = vdwg.mxu0
      %v523 = vmax.f32 %v509, 0.0
      %v524 = vmax.f32 %v512, 0.0
      %v525 = vmax.f32 %v517, 0.0
      %v526 = vmax.f32 %v520, 0.0
      %v527 = vld [vmem:[%s331] sm:$0xff]
      %v528 = vld [vmem:[%s331 + $0x8] sm:$0xff]
      %v529 = vld [vmem:[%s331 + $0x10] sm:$0xff]
      %v530 = vld [vmem:[%s331 + $0x18] sm:$0xff]
      %v531 = vsel %vm383, %v527, -inf
      %532 = vmax.xlane.f32.xlu0 %v531
      %v533 = vpop.xlane.xlu0 %532
      %v534 = vsel %vm383, %v528, -inf
      %535 = vmax.xlane.f32.xlu0 %v534
      %v536 = vpop.xlane.xlu0 %535
      %v537 = vsel %vm383, %v529, -inf
      %538 = vmax.xlane.f32.xlu0 %v537
      %v539 = vpop.xlane.xlu0 %538
      %v540 = vsel %vm383, %v530, -inf
      %541 = vmax.xlane.f32.xlu0 %v540
      %v542 = vpop.xlane.xlu0 %541
      %v543 = vsub.f32 %v527, %v533
      %v544 = vsub.f32 %v528, %v536
      %v545 = vsub.f32 %v529, %v539
      %v546 = vsub.f32 %v530, %v542
      %v547 = vmul.f32 %v543, 1.442695
      %v548 = vpow.pop %v547
      %v549 = vmul.f32 %v544, 1.442695
      %v550 = vpow.pop %v549
      %v551 = vmul.f32 %v545, 1.442695
      %v552 = vpow.pop %v551
      %v553 = vmul.f32 %v546, 1.442695
      %v554 = vpow.pop %v553
      %v555 = vsel %vm383, %v548, 0.0
      %556 = vadd.xlane.f32.xlu0 %v555
      %v557 = vpop.xlane.xlu0 %556
      %v558 = vsel %vm383, %v550, 0.0
      %559 = vadd.xlane.f32.xlu0 %v558
      %v560 = vpop.xlane.xlu0 %559
      %v561 = vsel %vm383, %v552, 0.0
      %562 = vadd.xlane.f32.xlu0 %v561
      %v563 = vpop.xlane.xlu0 %562
      %v564 = vsel %vm383, %v554, 0.0
      %565 = vadd.xlane.f32.xlu0 %v564
      %v566 = vpop.xlane.xlu0 %565
      %v567 = vrcp.pop %v557
      %v568 = vrcp.pop %v560
      %v569 = vrcp.pop %v563
      %v570 = vrcp.pop %v566
      %v571 = vmul.f32 %v548, %v567
      %v572 = vmul.f32 %v550, %v568
      %v573 = vmul.f32 %v552, %v569
      %v574 = vmul.f32 %v554, %v570
      %v575 = vpack.c.bf16 %v572, %v571
      %v576 = vpack.c.bf16 %v574, %v573
      %v577 = vld [vmem:[%s6] sm:$0xf]
      %v578 = vld [vmem:[%s6 + $0x4] sm:$0xf]
      %v579 = vld [vmem:[%s6 + $0x8] sm:$0xf]
      %v580 = vld [vmem:[%s6 + $0xc] sm:$0xf]
      %v585 = vunpack.c.l.b16 %v577
      %v586 = vunpack.c.l.b16 %v578
      %v587 = vunpack.c.l.b16 %v579
      %v588 = vunpack.c.l.b16 %v580
      %v589 = vpack.c.b16 %v586, %v585
      %v590 = vpack.c.b16 %v588, %v587
      %v594 = vsel %vm383, %v575, 0
      %v597 = vsel %vm383, %v576, 0
      %599 = vmatprep.subr.bf16.mxu0 0
      %600 = vmatpush1.bf16.msra.mxu0 0
      %601 = vmatprep.subr.bf16.mxu0 0
      %602 = vmatpush1.bf16.msra.mxu0 0
      %603 = vmatprep.subr.bf16.mxu0 0
      %604 = vmatpush1.bf16.msra.mxu0 0
      %605 = vmatprep.subr.bf16.mxu0 0
      %606 = vmatpush1.bf16.msra.mxu0 0
      %607 = vmatprep.subr.bf16.mxu0 0
      %608 = vmatpush1.bf16.msra.mxu0 0
      %609 = vmatprep.subr.bf16.mxu0 0
      %610 = vmatpush1.bf16.msra.mxu0 0
      %611 = vmatprep.subr.bf16.mxu0 0
      %612 = vmatpush1.bf16.msra.mxu0 %v590
      %613 = vmatprep.subr.bf16.mxu0 0
      %614 = vmatpush1.bf16.msra.mxu0 %v589
      %615 = vmatprep.subr.bf16.mxu0 0
      %616 = vmatpush2.bf16.msra.mxu0 0
      %617 = vmatprep.subr.bf16.mxu0 0
      %618 = vmatpush2.bf16.msra.mxu0 0
      %619 = vmatprep.subr.bf16.mxu0 0
      %620 = vmatpush2.bf16.msra.mxu0 0
      %621 = vmatprep.subr.bf16.mxu0 0
      %622 = vmatpush2.bf16.msra.mxu0 0
      %623 = vmatprep.subr.bf16.mxu0 0
      %624 = vmatpush2.bf16.msra.mxu0 0
      %625 = vmatprep.subr.bf16.mxu0 0
      %626 = vmatpush2.bf16.msra.mxu0 0
      %627 = vmatprep.subr.bf16.mxu0 0
      %628 = vmatpush2.bf16.msra.mxu0 0
      %629 = vmatprep.subr.bf16.mxu0 0
      %630 = vmatpush2.bf16.msra.mxu0 0
      %631 = vmatprep.mubr.bf16.mxu0 0
      %632 = vmatmul.mubr.bf16.gmra.mxu0 %v594
      %v633 = vpop.f32.mrf.mxu0
      %v634 = vadd.f32 0.0, %v633
      %v635 = vpop.f32.mrf.mxu0
      %v636 = vpop.f32.mrf.mxu0
      %v637 = vadd.f32 0.0, %v636
      %v638 = vpop.f32.mrf.mxu0
      %639 = vmatprep.mubr.bf16.mxu0 0
      %640 = vmatmul.mubr.bf16.gmra.mxu0 %v597
      %v641 = vpop.f32.mrf.mxu0
      %v642 = vadd.f32 0.0, %v641
      %v643 = vpop.f32.mrf.mxu0
      %v644 = vpop.f32.mrf.mxu0
      %v645 = vadd.f32 0.0, %v644
      %v646 = vpop.f32.mrf.mxu0
      %647 = vdwg.mxu0
      %v648 = vadd.f32 %v523, %v634
      %v649 = vadd.f32 %v524, %v637
      %v650 = vadd.f32 %v525, %v642
      %v651 = vadd.f32 %v526, %v645
      %vm652 = vcmask 31744
      %653 = vst.msk [vmem:[%s337] sm:$0xff] %vm652, %v648
      %654 = vst.msk [vmem:[%s337 + $0x8] sm:$0xff] %vm652, %v649
      %655 = vst.msk [vmem:[%s337 + $0x10] sm:$0xff] %vm652, %v650
      %656 = vst.msk [vmem:[%s337 + $0x18] sm:$0xff] %vm652, %v651
      %661 = vrot.lane.b32.xlu0 %v648, 124
      %v662 = vpop.permute.xlu0 %661
      %663 = vrot.lane.b32.xlu0 %v649, 124
      %v664 = vpop.permute.xlu0 %663
      %665 = vrot.lane.b32.xlu0 %v650, 124
      %v666 = vpop.permute.xlu0 %665
      %667 = vrot.lane.b32.xlu0 %v651, 124
      %v668 = vpop.permute.xlu0 %667
      %vm673 = vcmask 97280
      %674 = vst.msk [vmem:[%s343] sm:$0xff] %vm673, %v662
      %675 = vst.msk [vmem:[%s343 + $0x8] sm:$0xff] %vm673, %v664
      %676 = vst.msk [vmem:[%s343 + $0x10] sm:$0xff] %vm673, %v666
      %677 = vst.msk [vmem:[%s343 + $0x18] sm:$0xff] %vm673, %v668
      %s678 = smul.u32 4, %s20
      %p679 = scmp.lt.s32.totalorder %s678, 7
      %s680 = scalar_select %p679, %s678, 7
      %s681 = smul.addr %s680, 8
      %s682 = scalar_lea.vmem %s7, %s681
      %s683 = smul.u32 4, %s20
      %p684 = scmp.lt.s32.totalorder %s683, 7
      %s685 = scalar_select %p684, %s683, 7
      %s686 = smul.addr %s685, 8
      %s687 = scalar_lea.vmem %s8, %s686
      // Predicated region
      $region49: #{tpu_custom_call.1} parent=47 // pred_check
        %p688 = pneg %p195
      $region50: #{tpu_custom_call.1} parent=47 // pred_check_branch
        %690 = sbr.rel (%p688) target = $region52
      $region51: #{tpu_custom_call.1} parent=47 // pred_region
        %s691 = smul.u32 4, %s20
      $region52: #{tpu_custom_call.1} parent=47 // pred_fallthru
        _
      // Predicated region
      $region53: #{tpu_custom_call.1} parent=47 // pred_check
        %p692 = pneg %p221
      $region54: #{tpu_custom_call.1} parent=47 // pred_check_branch
        %694 = sbr.rel (%p692) target = $region56
      $region55: #{tpu_custom_call.1} parent=47 // pred_region
        %s695 = smul.u32 4, %s20
      $region56: #{tpu_custom_call.1} parent=47 // pred_fallthru
        _
    $region48: #{tpu_custom_call.1} parent=5 // pred_fallthru
      _
    %p696 = scmp.le.s32.totalorder 2, %s15
    // Predicated region
    $region57: #{tpu_custom_call.1} parent=5 // pred_check
      %p697 = pneg %p696
    $region58: #{tpu_custom_call.1} parent=5 // pred_check_branch
      %699 = sbr.rel (%p697) target = $region60
    $region59: #{tpu_custom_call.1} parent=5 // pred_region
      %s700 = ssub.s32 %s15, 2
      // Predicated region
      $region61: #{tpu_custom_call.1} parent=59 // pred_check
        %p701 = pneg %p201
      $region62: #{tpu_custom_call.1} parent=59 // pred_check_branch
        %703 = sbr.rel (%p701) target = $region64
      $region63: #{tpu_custom_call.1} parent=59 // pred_region
        %s704 = smul.u32 4, %s21
        %p705 = scmp.lt.s32.totalorder %s704, 7
        %s706 = scalar_select %p705, %s704, 7
        %s707 = smul.addr %s706, 8
        %s708 = scalar_lea.vmem %s7, %s707
      $region64: #{tpu_custom_call.1} parent=59 // pred_fallthru
        _
      // Predicated region
      $region65: #{tpu_custom_call.1} parent=59 // pred_check
        %p709 = pneg %p227
      $region66: #{tpu_custom_call.1} parent=59 // pred_check_branch
        %711 = sbr.rel (%p709) target = $region68
      $region67: #{tpu_custom_call.1} parent=59 // pred_region
        %s712 = smul.u32 4, %s21
        %p713 = scmp.lt.s32.totalorder %s712, 7
        %s714 = scalar_select %p713, %s712, 7
        %s715 = smul.addr %s714, 8
        %s716 = scalar_lea.vmem %s8, %s715
      $region68: #{tpu_custom_call.1} parent=59 // pred_fallthru
        _
    $region60: #{tpu_custom_call.1} parent=5 // pred_fallthru
      _
  $region6: #{tpu_custom_call.1} parent=0 // loop_footer
    %s19 = sadd.s32 1, %s15
  $region7: #{tpu_custom_call.1} parent=0 // loop_footer_branch
    %14 = sbr.rel target = $region3
  $region8: #{tpu_custom_call.1} parent=0 // loop_exit
    _

</llo_original>
